<compile_context>
chip_gen: v7x
topology: tpu7x:2x2x1
jax: 0.10.0
libtpu: 0.0.40
codegen_flags: <defaults>
</compile_context>

<pallas_src>
import functools

import jax
import jax.numpy as jnp
from jax import lax
from jax.experimental import pallas as pl
from jax.experimental.pallas import tpu as pltpu

_PAIRWISE_EPS = 1e-6  # torch.nn.functional.pairwise_distance default eps


def _contrastive_loss_kernel(o1_ref, o2_ref, label_ref, out_ref, acc_ref, *,
                             margin, batch, tile_b):
    i = pl.program_id(0)

    @pl.when(i == 0)
    def _init():
        acc_ref[...] = jnp.zeros_like(acc_ref)

    # Inputs arrive in their HBM dtype (e.g. bf16); cast after the DMA so HBM
    # traffic stays at the narrow width. VALU has plenty of slack here.
    o1 = o1_ref[...].astype(jnp.float32)           # (tile_b, D)
    o2 = o2_ref[...].astype(jnp.float32)           # (tile_b, D)
    lab = label_ref[...].astype(jnp.float32)       # (tile_b, 1)

    diff = o1 - o2 + _PAIRWISE_EPS                 # matches torch pairwise_distance eps
    d2 = jnp.sum(diff * diff, axis=-1, keepdims=True)   # (tile_b, 1) squared distance
    d = jnp.sqrt(d2)                                     # euclidean_distance

    hinge = jnp.maximum(margin - d, 0.0)
    # positive term uses d2 directly (== pow(d, 2)): fewer ops, better numerics
    per_example = (1.0 - lab) * d2 + lab * (hinge * hinge)   # (tile_b, 1)

    if batch % tile_b != 0:
        # Mask padded tail rows of the last (partial) batch tile.
        row = lax.broadcasted_iota(jnp.int32, per_example.shape, 0)
        per_example = jnp.where(i * tile_b + row < batch, per_example, 0.0)

    acc_ref[...] += jnp.sum(per_example, keepdims=True)

    @pl.when(i == pl.num_programs(0) - 1)
    def _finalize():
        # mean = accumulated global sum * (1 / B); single scalar op at the end.
        out_ref[...] = acc_ref[...] * (1.0 / batch)


def _pick_tile_b(batch, dim, itemsize):
    """Largest batch tile s.t. 2 inputs x 2 pipeline buffers stay <= ~16 MiB."""
    lane_padded_d = max(128, ((dim + 127) // 128) * 128)   # VMEM lane padding
    bytes_per_row = 2 * 2 * lane_padded_d * itemsize       # 2 inputs x 2 buffers
    tb = (16 * 1024 * 1024) // max(bytes_per_row, 1)
    tb = int(max(8, min(tb, 2048)))
    if tb >= batch:
        return batch
    return max(8, (tb // 8) * 8)                           # sublane-aligned


def contrastive_loss(output1, output2, label, margin=2.0, tile_b=None):
    """output1, output2: (B, D); label: (B,). Returns scalar f32 loss."""
    B, D = output1.shape
    label2d = label.reshape(B, 1)

    if tile_b is None:
        tile_b = _pick_tile_b(B, D, output1.dtype.itemsize)
    tile_b = int(min(tile_b, B))
    if tile_b < B:
        tile_b = max(8, (tile_b // 8) * 8)
    num_tiles = pl.cdiv(B, tile_b)

    kernel = functools.partial(
        _contrastive_loss_kernel,
        margin=float(margin), batch=B, tile_b=tile_b)

    out = pl.pallas_call(
        kernel,
        out_shape=jax.ShapeDtypeStruct((1, 1), jnp.float32),
        grid_spec=pltpu.PrefetchScalarGridSpec(
            num_scalar_prefetch=0,
            grid=(num_tiles,),
            in_specs=[
                pl.BlockSpec((tile_b, D), lambda i: (i, 0)),
                pl.BlockSpec((tile_b, D), lambda i: (i, 0)),
                pl.BlockSpec((tile_b, 1), lambda i: (i, 0)),
            ],
            out_specs=pl.BlockSpec((1, 1), lambda i: (0, 0)),
            scratch_shapes=[pltpu.VMEM((1, 1), jnp.float32)],
        ),
        compiler_params=pltpu.CompilerParams(
            dimension_semantics=("arbitrary",),      # batch-tile reduction axis
            vmem_limit_bytes=32 * 1024 * 1024,
        ),
    )(output1, output2, label2d)
    return out[0, 0]


def _reference(output1, output2, label, margin=2.0):
    diff = output1 - output2 + _PAIRWISE_EPS
    d = jnp.sqrt(jnp.sum(diff * diff, axis=-1))
    hinge = jnp.maximum(margin - d, 0.0)
    return jnp.mean((1.0 - label) * d * d + label * hinge * hinge)


if __name__ == "__main__":
    key = jax.random.PRNGKey(0)
    k1, k2, k3, k4, k5, k6 = jax.random.split(key, 6)

    # Test 1: f32 inputs at the shapes implied by the siamese model
    # (batch of 8 embedding pairs, hidden dim 32) -> single tile.
    B, D = 8, 32
    o1 = jax.random.normal(k1, (B, D), dtype=jnp.float32)
    o2 = jax.random.normal(k2, (B, D), dtype=jnp.float32)
    lab = jax.random.bernoulli(k3, 0.5, (B,)).astype(jnp.float32)

    loss = jax.block_until_ready(contrastive_loss(o1, o2, lab))
    ref = _reference(o1, o2, lab)
    assert jnp.allclose(loss, ref, rtol=1e-5, atol=1e-5), (loss, ref)

    # Test 2: bf16 inputs (narrow in HBM, upcast in-kernel) with the batch
    # axis tiled and a masked ragged tail (B=20, tile_b=8 -> 3 grid steps).
    B2, D2 = 20, 32
    o1b = jax.random.normal(k4, (B2, D2), dtype=jnp.bfloat16)
    o2b = jax.random.normal(k5, (B2, D2), dtype=jnp.bfloat16)
    labb = jax.random.bernoulli(k6, 0.5, (B2,)).astype(jnp.float32)

    loss2 = jax.block_until_ready(contrastive_loss(o1b, o2b, labb, tile_b=8))
    ref2 = _reference(o1b.astype(jnp.float32), o2b.astype(jnp.float32), labb)
    assert jnp.allclose(loss2, ref2, rtol=1e-4, atol=1e-4), (loss2, ref2)

    print("KERNEL_OK")
</pallas_src>

<mosaic_0001>
module attributes {stable_mosaic.version = 11 : i64} {
  func.func @_contrastive_loss_kernel(%arg0: i32, %arg1: memref<8x32xf32, #tpu.memory_space<vmem>>, %arg2: memref<8x32xf32, #tpu.memory_space<vmem>>, %arg3: memref<8x1xf32, #tpu.memory_space<vmem>>, %arg4: memref<1x1xf32, #tpu.memory_space<vmem>>, %arg5: memref<1x1xf32, #tpu.memory_space<vmem>>) attributes {dimension_semantics = [#tpu.dimension_semantics<arbitrary>], iteration_bounds = array<i64: 1>, scalar_prefetch = 0 : i64, scratch_operands = 1 : i64, tpu.core_type = #tpu.core_type<tc>, window_params = [{transform_indices = @transform_0, window_bounds = array<i64: 8, 32>}, {transform_indices = @transform_1, window_bounds = array<i64: 8, 32>}, {transform_indices = @transform_2, window_bounds = array<i64: 8, 1>}, {pipeline_mode = #tpu.pipeline_mode<synchronous>, transform_indices = @transform_3, window_bounds = array<i64: 1, 1>}]} {
    %c0_i32 = arith.constant 0 : i32
    %0 = arith.cmpi eq, %arg0, %c0_i32 : i32
    %1 = arith.extui %0 : i1 to i32
    %c0_i32_0 = arith.constant 0 : i32
    %2 = arith.cmpi ne, %1, %c0_i32_0 : i32
    scf.if %2 {
      %cst_17 = arith.constant 0.000000e+00 : f32
      %34 = vector.broadcast %cst_17 : f32 to vector<1x1xf32>
      %c0_18 = arith.constant 0 : index
      %c0_19 = arith.constant 0 : index
      %35 = vector.load %arg5[%c0_18, %c0_19] : memref<1x1xf32, #tpu.memory_space<vmem>>, vector<1x1xf32>
      tpu.vector_store %arg5[%c0_18, %c0_19], %34 {strides = array<i32>} : memref<1x1xf32, #tpu.memory_space<vmem>>, vector<1x1xf32>,
    } else {
    }
    %c0 = arith.constant 0 : index
    %c0_1 = arith.constant 0 : index
    %3 = vector.load %arg1[%c0, %c0_1] : memref<8x32xf32, #tpu.memory_space<vmem>>, vector<8x32xf32>
    %c0_2 = arith.constant 0 : index
    %c0_3 = arith.constant 0 : index
    %4 = vector.load %arg2[%c0_2, %c0_3] : memref<8x32xf32, #tpu.memory_space<vmem>>, vector<8x32xf32>
    %c0_4 = arith.constant 0 : index
    %c0_5 = arith.constant 0 : index
    %5 = vector.load %arg3[%c0_4, %c0_5] : memref<8x1xf32, #tpu.memory_space<vmem>>, vector<8x1xf32>
    %6 = arith.subf %3, %4 : vector<8x32xf32>
    %cst = arith.constant 9.99999997E-7 : f32
    %7 = vector.broadcast %cst : f32 to vector<8x32xf32>
    %8 = arith.addf %6, %7 : vector<8x32xf32>
    %9 = arith.mulf %8, %8 : vector<8x32xf32>
    %cst_6 = arith.constant dense<0.000000e+00> : vector<8xf32>
    %10 = vector.multi_reduction <add>, %9, %cst_6 [1] : vector<8x32xf32> to vector<8xf32>
    %11 = vector.shape_cast %10 : vector<8xf32> to vector<8x1xf32>
    %12 = math.sqrt %11 : vector<8x1xf32>
    %cst_7 = arith.constant 2.000000e+00 : f32
    %13 = vector.broadcast %cst_7 : f32 to vector<8x1xf32>
    %14 = arith.subf %13, %12 : vector<8x1xf32>
    %cst_8 = arith.constant 0.000000e+00 : f32
    %15 = vector.broadcast %cst_8 : f32 to vector<8x1xf32>
    %16 = arith.maximumf %14, %15 : vector<8x1xf32>
    %cst_9 = arith.constant 1.000000e+00 : f32
    %17 = vector.broadcast %cst_9 : f32 to vector<8x1xf32>
    %18 = arith.subf %17, %5 : vector<8x1xf32>
    %19 = arith.mulf %18, %11 : vector<8x1xf32>
    %20 = arith.mulf %16, %16 : vector<8x1xf32>
    %21 = arith.mulf %5, %20 : vector<8x1xf32>
    %22 = arith.addf %19, %21 : vector<8x1xf32>
    %c0_10 = arith.constant 0 : index
    %c0_11 = arith.constant 0 : index
    %23 = vector.load %arg5[%c0_10, %c0_11] : memref<1x1xf32, #tpu.memory_space<vmem>>, vector<1x1xf32>
    %24 = vector.shape_cast %22 : vector<8x1xf32> to vector<1x8x1xf32>
    %cst_12 = arith.constant dense<0.000000e+00> : vector<1xf32>
    %25 = vector.multi_reduction <add>, %24, %cst_12 [1, 2] : vector<1x8x1xf32> to vector<1xf32>
    %26 = vector.shape_cast %25 : vector<1xf32> to vector<1x1x1xf32>
    %27 = vector.extract %26[0, 0, 0] : f32 from vector<1x1x1xf32>
    %28 = vector.broadcast %27 : f32 to vector<1x1xf32>
    %29 = arith.addf %23, %28 : vector<1x1xf32>
    %c0_13 = arith.constant 0 : index
    %c0_14 = arith.constant 0 : index
    %30 = vector.load %arg5[%c0_13, %c0_14] : memref<1x1xf32, #tpu.memory_space<vmem>>, vector<1x1xf32>
    tpu.vector_store %arg5[%c0_13, %c0_14], %29 {strides = array<i32>} : memref<1x1xf32, #tpu.memory_space<vmem>>, vector<1x1xf32>,
    %c0_i32_15 = arith.constant 0 : i32
    %31 = arith.cmpi eq, %arg0, %c0_i32_15 : i32
    %32 = arith.extui %31 : i1 to i32
    %c0_i32_16 = arith.constant 0 : i32
    %33 = arith.cmpi ne, %32, %c0_i32_16 : i32
    scf.if %33 {
      %c0_17 = arith.constant 0 : index
      %c0_18 = arith.constant 0 : index
      %34 = vector.load %arg5[%c0_17, %c0_18] : memref<1x1xf32, #tpu.memory_space<vmem>>, vector<1x1xf32>
      %cst_19 = arith.constant 1.250000e-01 : f32
      %35 = vector.broadcast %cst_19 : f32 to vector<1x1xf32>
      %36 = arith.mulf %34, %35 : vector<1x1xf32>
      %c0_20 = arith.constant 0 : index
      %c0_21 = arith.constant 0 : index
      %37 = vector.load %arg4[%c0_20, %c0_21] : memref<1x1xf32, #tpu.memory_space<vmem>>, vector<1x1xf32>
      tpu.vector_store %arg4[%c0_20, %c0_21], %36 {strides = array<i32>} : memref<1x1xf32, #tpu.memory_space<vmem>>, vector<1x1xf32>,
    } else {
    }
    return
  }
  func.func @transform_0(%arg0: i32) -> (i32, i32) {
    %c0_i32 = arith.constant 0 : i32
    %c0_i32_0 = arith.constant 0 : i32
    return %arg0, %c0_i32 : i32, i32
  }
  func.func @transform_1(%arg0: i32) -> (i32, i32) {
    %c0_i32 = arith.constant 0 : i32
    %c0_i32_0 = arith.constant 0 : i32
    return %arg0, %c0_i32 : i32, i32
  }
  func.func @transform_2(%arg0: i32) -> (i32, i32) {
    %c0_i32 = arith.constant 0 : i32
    %c0_i32_0 = arith.constant 0 : i32
    return %arg0, %c0_i32 : i32, i32
  }
  func.func @transform_3(%arg0: i32) -> (i32, i32) {
    %c0_i32 = arith.constant 0 : i32
    %c0_i32_0 = arith.constant 0 : i32
    %c0_i32_1 = arith.constant 0 : i32
    return %c0_i32, %c0_i32_0 : i32, i32
  }
}

</mosaic_0001>

<llo_original>
// kernel: tpu_custom_call.1
$region0: #{tpu_custom_call.1}
  #allocation0 [shape = 'u32[]', space=smem, size = 0x4, offset = 0x4, fixed_abs, tag = 'smem constant byte address 0x4 - core index']
  #allocation1 [shape = 'u32[144,128]{1,0:T(1,128)}', space=vmem, size = 0x12000, scoped, tag = 'internal scratch']
  #allocation2 [shape = 'f32[1,1]{1,0:T(1,128)}', space=vmem, size = 0x200, scoped, tag = 'scratch operand']
  %s0 = inlined_call_operand.vmem [shape: f32[8,32], index: 0, kind: input, shape index: {}]
  %s1 = inlined_call_operand.hbm [shape: f32[8,32], index: 1, kind: input, shape index: {}]
  %s2 = inlined_call_operand.vmem [shape: f32[8,1], index: 2, kind: input, shape index: {}]
  %s3 = inlined_call_operand.hbm [shape: f32[1,1], index: 3, kind: output, shape index: {}]
  %s4 = sld [smem:[#allocation0]]
  $region34: #{tpu_custom_call.1} parent=0
    _
  %s6 = ssub.s32 1, %s4
  %s7 = scalar_select 0, %s6, %s4
  $region1: #{tpu_custom_call.1} parent=0
    #allocation3 [shape = 'u8[4096]{0}', space=vmem, size = 0x1000, scoped, tag = 'input window, operand 1, single buffered']
    #allocation4 [shape = 's32[1]{0}', space=sflag, size = 0x4, scoped, tag = 'scoped memory for tpu_custom_call.1']
    #allocation5 [shape = 's32[1]{0}', space=sflag, size = 0x4, scoped, tag = 'scoped memory for tpu_custom_call.1']
    #allocation6 [shape = 'u8[512]{0}', space=vmem, size = 0x400, scoped, tag = 'output window, operand 0, single buffered']
    %8 = vsyncpa [#allocation4], 0
    %9 = vsyncpa [#allocation5], 0
    // Predicated region
    $region2: #{tpu_custom_call.1} parent=1 // pred_check
      _
    $region3: #{tpu_custom_call.1} parent=1 // pred_check_branch
      %11 = sbr.rel (0) target = $region5
    $region4: #{tpu_custom_call.1} parent=1 // pred_region
      _
    $region5: #{tpu_custom_call.1} parent=1 // pred_fallthru
      _
    // Predicated region
    $region6: #{tpu_custom_call.1} parent=1 // pred_check
      _
    $region7: #{tpu_custom_call.1} parent=1 // pred_check_branch
      %13 = sbr.rel (0) target = $region9
    $region8: #{tpu_custom_call.1} parent=1 // pred_region
      %s15 = ssub.s32 128, 128
      %16 = vsyncadd [#allocation4], %s15
      %s18 = sshll.u32 [#allocation3], 4
      %s19 = int_to_ptr.vmem [resolvable:$true] %s18
      %21 = dma.hbm_to_vmem [thread:$0]  %s1, 128, %s19, [#allocation4]
    $region9: #{tpu_custom_call.1} parent=1 // pred_fallthru
      _
    // Predicated region
    $region10: #{tpu_custom_call.1} parent=1 // pred_check
      _
    $region11: #{tpu_custom_call.1} parent=1 // pred_check_branch
      %23 = sbr.rel (0) target = $region13
    $region12: #{tpu_custom_call.1} parent=1 // pred_region
      _
    $region13: #{tpu_custom_call.1} parent=1 // pred_fallthru
      _
    // Predicated region
    $region14: #{tpu_custom_call.1} parent=1 // pred_check
      _
    $region15: #{tpu_custom_call.1} parent=1 // pred_check_branch
      %25 = sbr.rel (0) target = $region17
    $region16: #{tpu_custom_call.1} parent=1 // pred_region
      %26 = dma.done [#allocation4], 128
    $region17: #{tpu_custom_call.1} parent=1 // pred_fallthru
      _
    %p27 = scmp.eq.s32.totalorder 0, 0
    // Predicated region
    $region18: #{tpu_custom_call.1} parent=1 // pred_check
      %p28 = pneg %p27
    $region19: #{tpu_custom_call.1} parent=1 // pred_check_branch
      %30 = sbr.rel (%p28) target = $region21
    $region20: #{tpu_custom_call.1} parent=1 // pred_region
      %vm31 = vcmask 0
      %32 = vst.msk [vmem:[#allocation2] sm:$0x1] %vm31, 0.0
    $region21: #{tpu_custom_call.1} parent=1 // pred_fallthru
      _
    %v33 = vld [vmem:[%s0] sm:$0xff]
    %v34 = vld [vmem:[#allocation3] sm:$0xff]
    %v35 = vld [vmem:[%s2] sm:$0xff]
    %v36 = vsub.f32 %v33, %v34
    %v37 = vadd.f32 %v36, 1e-06
    %v38 = vmul.f32 %v37, %v37
    %vm39 = vcmask 261120
    %v40 = vsel %vm39, %v38, 0.0
    %41 = vadd.xlane.f32.xlu0 %v40
    %v42 = vpop.xlane.xlu0 %41
    %v43 = vrsqrt.pop %v42
    %v44 = vmul.f32 %v42, %v43
    %vm45 = vcmp.eq.f32.partialorder %v42, inf
    %v46 = vsel %vm45, %v42, %v44
    %vm47 = vcmp.eq.f32.partialorder %v42, 0.0
    %v48 = vand.u32 %v42, 2147483648
    %v49 = vsel %vm47, %v48, %v46
    %v50 = vsub.f32 2.0, %v49
    %v51 = vmax.f32 %v50, 0.0
    %v52 = vsub.f32 1.0, %v35
    %v53 = vmul.f32 %v52, %v42
    %v54 = vmul.f32 %v51, %v51
    %v55 = vmul.f32 %v35, %v54
    %v56 = vadd.f32 %v53, %v55
    %v57 = vld [vmem:[#allocation2] sm:$0x1]
    %vm58 = vcmask 7168
    %v59 = vsel %vm58, %v56, 0.0
    %60 = vadd.xlane.f32.xlu0 %v59
    %v61 = vpop.xlane.xlu0 %60
    %v62 = vrot.slane %v61, 4
    %v63 = vadd.f32 %v61, %v62
    %v64 = vrot.slane %v63, 2
    %v65 = vadd.f32 %v63, %v64
    %v66 = vrot.slane %v65, 1
    %v67 = vadd.f32 %v65, %v66
    %s68 = vtos %v67
    %v69 = vstv %s68
    %v70 = vadd.f32 %v57, %v69
    %vm71 = vcmask 0
    %72 = vst.msk [vmem:[#allocation2] sm:$0x1] %vm71, %v70
    // Predicated region
    $region22: #{tpu_custom_call.1} parent=1 // pred_check
      %p73 = pneg %p27
    $region23: #{tpu_custom_call.1} parent=1 // pred_check_branch
      %75 = sbr.rel (%p73) target = $region25
    $region24: #{tpu_custom_call.1} parent=1 // pred_region
      %v76 = vld [vmem:[#allocation2] sm:$0x1]
      %v77 = vmul.f32 %v76, 0.125
      %78 = vst.msk [vmem:[#allocation6] sm:$0x1] %vm71, %v77
    $region25: #{tpu_custom_call.1} parent=1 // pred_fallthru
      _
    // Predicated region
    $region26: #{tpu_custom_call.1} parent=1 // pred_check
      _
    $region27: #{tpu_custom_call.1} parent=1 // pred_check_branch
      %80 = sbr.rel (0) target = $region29
    $region28: #{tpu_custom_call.1} parent=1 // pred_region
      %s82 = ssub.s32 16, 16
      %83 = vsyncadd [#allocation5], %s82
      %s85 = sshll.u32 [#allocation6], 4
      %s86 = int_to_ptr.vmem [resolvable:$true] %s85
      %88 = dma.vmem_to_hbm [thread:$0]  %s86, 16, %s3, [#allocation5]
    $region29: #{tpu_custom_call.1} parent=1 // pred_fallthru
      _
    // Predicated region
    $region30: #{tpu_custom_call.1} parent=1 // pred_check
      _
    $region31: #{tpu_custom_call.1} parent=1 // pred_check_branch
      %90 = sbr.rel (0) target = $region33
    $region32: #{tpu_custom_call.1} parent=1 // pred_region
      %91 = dma.done [#allocation5], 16
    $region33: #{tpu_custom_call.1} parent=1 // pred_fallthru
      _
    %92 = vsyncpa [#allocation4], 1
    %93 = vsyncpa [#allocation5], 1

</llo_original>
